<compile_context>
chip_gen: v7x
topology: tpu7x:2x2x1
jax: 0.10.0
libtpu: 0.0.40
codegen_flags: <defaults>
</compile_context>

<pallas_src>
import functools

import jax
import jax.numpy as jnp
from jax.experimental import pallas as pl
from jax.experimental.pallas import tpu as pltpu

PAD = 128  # lane-dense pad width for every feature / class axis


# ----------------------------------------------------------------------------
# Fused Pallas kernel: entire JAWS forward (hidden GCN layers + predictor)
# ----------------------------------------------------------------------------
def _jaws_fused_kernel(a_ref, x_ref, w_ref, b_ref, o_ref, *, num_hidden):
    """Whole forward pass.

    a_ref: (N, N)        bf16  symmetric-normalized adjacency
    x_ref: (N, 128)      bf16  node features zero-padded to 128 lanes
    w_ref: (256*L, 128)  bf16  weight slab: L hidden blocks (128 rows each)
                               followed by the predictor block (128*L rows)
    b_ref: (L+1, 128)    f32   bias slab (row L = predictor bias, padded
                               classes = -1e30)
    o_ref: (N, 128)      f32   padded class probabilities (lane-dense store)
    """
    op = a_ref.dtype
    L = num_hidden
    a = a_ref[...]
    b = b_ref[...]                                        # loaded once, sliced as a value

    # --- layer 0, reassociated:  h1 = relu(A @ (X @ W1) + b1) ---------------
    # A @ h0 is never reused by the predictor, so contract the tiny feature
    # width first and give the N^2 matmul a 128-lane-dense RHS.
    xw = jnp.dot(x_ref[...], w_ref[0:PAD, :], preferred_element_type=jnp.float32)
    h = jnp.maximum(
        jnp.dot(a, xw.astype(op), preferred_element_type=jnp.float32) + b[0:1, :],
        0.0).astype(op)                                   # h_1  (N, 128)

    # --- layers 1..L-1: keep (A @ h) @ W so A @ h_i is reused below ---------
    zs = []
    for i in range(1, L):
        ah = jnp.dot(a, h, preferred_element_type=jnp.float32)   # A @ h_i
        ah_b = ah.astype(op)                              # single f32->bf16 cast
        zs.append(ah_b)                                   # reused by predictor
        hw = jnp.dot(ah_b, w_ref[PAD * i:PAD * (i + 1), :],
                     preferred_element_type=jnp.float32)
        h = jnp.maximum(hw + b[i:i + 1, :], 0.0).astype(op)      # h_{i+1}
    # aggregated last hidden output: A @ h_L (predictor only)
    zs.append(jnp.dot(a, h, preferred_element_type=jnp.float32).astype(op))

    # --- predictor: ONE matmul on the concatenated aggregated hiddens -------
    #   y = [A@h_1 | ... | A@h_L] @ Wp_pad + bp_pad
    z_cat = jnp.concatenate(zs, axis=-1) if L > 1 else zs[0]     # (N, 128*L)
    y = jnp.dot(z_cat, w_ref[PAD * L:2 * PAD * L, :],
                preferred_element_type=jnp.float32) + b[L:L + 1, :]

    # --- row softmax over the 128-lane padded class axis --------------------
    m = jnp.max(y, axis=-1, keepdims=True)
    e = jnp.exp(y - m)                                    # padded cols -> exactly 0
    denom = jnp.sum(e, axis=-1, keepdims=True)
    o_ref[...] = (e * pl.reciprocal(denom, approx=True)).astype(o_ref.dtype)


# ----------------------------------------------------------------------------
# One-time parameter preparation (hoisted out of the per-call forward)
# ----------------------------------------------------------------------------
def prepare_params(params, a_hat, operand_dtype=jnp.bfloat16):
    """Pack all weights into one bf16 slab and all biases into one f32 slab."""
    hidden_dims = tuple(int(w.shape[1]) for w, _ in params["layers"])
    num_features = int(params["layers"][0][0].shape[0])
    n_classes = int(params["pred_w"].shape[1])
    L = len(hidden_dims)
    assert num_features <= PAD and max(hidden_dims) <= PAD and n_classes <= PAD

    w_slab = jnp.zeros((2 * PAD * L, PAD), jnp.float32)
    b_slab = jnp.zeros((L + 1, PAD), jnp.float32)
    for i, (w, bias) in enumerate(params["layers"]):
        d_in, d_out = w.shape
        w_slab = w_slab.at[PAD * i:PAD * i + d_in, :d_out].set(w)
        b_slab = b_slab.at[i, :d_out].set(bias)
    # predictor block: for hidden output i, rows [PAD*L + PAD*i, ... + d_i)
    off = 0
    for i, d in enumerate(hidden_dims):
        w_slab = w_slab.at[PAD * L + PAD * i:PAD * L + PAD * i + d,
                           :n_classes].set(params["pred_w"][off:off + d])
        off += d
    # -1e30 bias padding keeps padded softmax classes at exactly 0 probability.
    # NOTE: b_slab must stay f32 (never cast to the bf16 operand dtype).
    b_slab = b_slab.at[L, :].set(-1e30)
    b_slab = b_slab.at[L, :n_classes].set(params["pred_b"])

    return dict(
        a_hat=a_hat.astype(operand_dtype),
        w_slab=w_slab.astype(operand_dtype),
        b_slab=b_slab,
        num_hidden=L,
        n_classes=n_classes,
    )


# ----------------------------------------------------------------------------
# Per-call forward wrapper
# ----------------------------------------------------------------------------
@functools.partial(jax.jit, static_argnames=("num_hidden", "n_classes"))
def jaws_forward(x, a_hat, w_slab, b_slab, *, num_hidden, n_classes):
    """Fused JAWSNetwork forward.  Everything except x is pre-prepared."""
    n, d0 = x.shape
    op_dtype = a_hat.dtype
    L = num_hidden
    # only x is cast + zero-padded per call (all other prep hoisted)
    x_pad = jnp.pad(x.astype(op_dtype), ((0, 0), (0, PAD - d0)))

    flops = (2 * n * PAD * PAD                 # x @ W1
             + 2 * n * n * PAD * (L + 1)       # aggregations A @ (.)
             + 2 * n * PAD * PAD * (L - 1)     # (A@h) @ W, layers 1..L-1
             + 2 * n * (PAD * L) * PAD)        # predictor matmul
    bytes_accessed = (a_hat.size * a_hat.dtype.itemsize
                      + x_pad.size * x_pad.dtype.itemsize
                      + w_slab.size * w_slab.dtype.itemsize
                      + b_slab.size * b_slab.dtype.itemsize
                      + n * PAD * 4)
    cost = pl.CostEstimate(flops=flops, transcendentals=n * PAD,
                           bytes_accessed=bytes_accessed)

    vmem_spec = pl.BlockSpec(memory_space=pltpu.MemorySpace.VMEM)
    out_padded = pl.pallas_call(
        functools.partial(_jaws_fused_kernel, num_hidden=num_hidden),
        out_shape=jax.ShapeDtypeStruct((n, PAD), jnp.float32),
        in_specs=[vmem_spec] * 4,
        out_specs=vmem_spec,
        compiler_params=pltpu.CompilerParams(
            # actual footprint is a few hundred KiB; keep the limit close to it
            # (fits v7x's 64 MiB VMEM with large headroom)
            vmem_limit_bytes=2 * 1024 * 1024),
        cost_estimate=cost,
    )(a_hat, x_pad, w_slab, b_slab)
    return out_padded[:, :n_classes]


# ----------------------------------------------------------------------------
# Plain-JAX glue (graph preprocessing + parameter init + reference)
# ----------------------------------------------------------------------------
def normalized_adjacency(edge_index, num_nodes):
    """Dense D^-1/2 (A + I) D^-1/2, matching PyG GCNConv defaults.

    Self-loops are set (not added) on the diagonal, so graphs that already
    contain self-loops are not double counted.
    """
    src = edge_index[0]
    dst = edge_index[1]
    a = jnp.zeros((num_nodes, num_nodes), jnp.float32)
    a = a.at[dst, src].set(1.0)              # row = destination, col = source
    a = jnp.where(jnp.eye(num_nodes, dtype=bool), 1.0, a)   # self-loops
    deg = jnp.sum(a, axis=1)
    d_inv_sqrt = jnp.where(deg > 0, 1.0 / jnp.sqrt(deg), 0.0)
    return d_inv_sqrt[:, None] * a * d_inv_sqrt[None, :]


def init_params(key, num_features, hidden_dims):
    """Deterministic Glorot-style init for each GCNConv's weight + bias."""
    all_dims = [num_features] + list(hidden_dims)
    layers = []
    for i in range(len(all_dims) - 1):
        key, kw = jax.random.split(key)
        fan_in, fan_out = all_dims[i], all_dims[i + 1]
        scale = jnp.sqrt(6.0 / (fan_in + fan_out))
        w = jax.random.uniform(kw, (fan_in, fan_out), jnp.float32, -scale, scale)
        b = jnp.zeros((fan_out,), jnp.float32)
        layers.append((w, b))
    key, kw = jax.random.split(key)
    pred_in = sum(hidden_dims)
    scale = jnp.sqrt(6.0 / (pred_in + 2))
    pred_w = jax.random.uniform(kw, (pred_in, 2), jnp.float32, -scale, scale)
    pred_b = jnp.zeros((2,), jnp.float32)
    return {"layers": layers, "pred_w": pred_w, "pred_b": pred_b}


def _reference_forward(x, a_hat, params):
    """Pure-JAX f32 reference of the same forward (for a sanity check)."""
    out = [x]
    for w, b in params["layers"]:
        out.append(jnp.maximum(a_hat @ (out[-1] @ w) + b, 0.0))
    h_cat = jnp.concatenate(out[1:], axis=-1)
    y = a_hat @ (h_cat @ params["pred_w"]) + params["pred_b"]
    return jax.nn.softmax(y, axis=-1)


if __name__ == "__main__":
    N = 16            # number of graph nodes
    NUM_FEATURES = 4
    HIDDEN_DIMS = [32, 32]

    key = jax.random.PRNGKey(0)
    key, kx = jax.random.split(key)
    x = jax.random.normal(kx, (N, NUM_FEATURES), jnp.float32)

    # deterministic bidirectional ring graph: edge_index [2, 2N]
    fwd_src = jnp.arange(N, dtype=jnp.int32)
    fwd_dst = (fwd_src + 1) % N
    edge_index = jnp.stack(
        [jnp.concatenate([fwd_src, fwd_dst]),
         jnp.concatenate([fwd_dst, fwd_src])], axis=0)

    params = init_params(key, NUM_FEATURES, HIDDEN_DIMS)

    # one-time (hoisted) prep: adjacency normalization + slab packing + casts
    a_hat = normalized_adjacency(edge_index, N)
    prep = prepare_params(params, a_hat)

    out = jax.block_until_ready(
        jaws_forward(x, prep["a_hat"], prep["w_slab"], prep["b_slab"],
                     num_hidden=prep["num_hidden"],
                     n_classes=prep["n_classes"]))

    assert out.shape == (N, 2), out.shape
    row_sums = jnp.sum(out, axis=1)
    # approx reciprocal (EUP vrcp) gives ~2^-12 relative error on the row sums
    assert bool(jnp.all(jnp.abs(row_sums - 1.0) < 2e-3)), row_sums

    # cross-check against the pure-JAX f32 reference (bf16 MXU operands ->
    # loose tolerance on the class probabilities)
    ref = _reference_forward(x, a_hat, params)
    max_err = jnp.max(jnp.abs(out - ref))
    assert bool(max_err < 5e-2), max_err

    print("KERNEL_OK")
</pallas_src>

<mosaic_0001>
module attributes {stable_mosaic.version = 11 : i64} {
  func.func @_jaws_fused_kernel(%arg0: memref<16x16xbf16, #tpu.memory_space<vmem>>, %arg1: memref<16x128xbf16, #tpu.memory_space<vmem>>, %arg2: memref<512x128xbf16, #tpu.memory_space<vmem>>, %arg3: memref<3x128xf32, #tpu.memory_space<vmem>>, %arg4: memref<16x128xf32, #tpu.memory_space<vmem>>) attributes {dimension_semantics = [], scalar_prefetch = 0 : i64, scratch_operands = 0 : i64, tpu.core_type = #tpu.core_type<tc>} {
    %c0 = arith.constant 0 : index
    %c0_0 = arith.constant 0 : index
    %0 = vector.load %arg0[%c0, %c0_0] : memref<16x16xbf16, #tpu.memory_space<vmem>>, vector<16x16xbf16>
    %c0_1 = arith.constant 0 : index
    %c0_2 = arith.constant 0 : index
    %1 = vector.load %arg3[%c0_1, %c0_2] : memref<3x128xf32, #tpu.memory_space<vmem>>, vector<3x128xf32>
    %c0_3 = arith.constant 0 : index
    %c0_4 = arith.constant 0 : index
    %2 = vector.load %arg1[%c0_3, %c0_4] : memref<16x128xbf16, #tpu.memory_space<vmem>>, vector<16x128xbf16>
    %c0_5 = arith.constant 0 : index
    %c0_6 = arith.constant 0 : index
    %3 = vector.load %arg2[%c0_5, %c0_6] : memref<512x128xbf16, #tpu.memory_space<vmem>>, vector<128x128xbf16>
    %cst = arith.constant dense<0.000000e+00> : vector<16x128xf32>
    %4 = tpu.matmul %2, %3, %cst {dimension_numbers = #tpu.dot_dimension_numbers<[1], [0], [0], [1], [0, 0, 1, 1], [], []>} : vector<16x128xbf16>, vector<128x128xbf16>, vector<16x128xf32> -> vector<16x128xf32>
    %5 = arith.truncf %4 : vector<16x128xf32> to vector<16x128xbf16>
    %cst_7 = arith.constant dense<0.000000e+00> : vector<16x128xf32>
    %6 = tpu.matmul %0, %5, %cst_7 {dimension_numbers = #tpu.dot_dimension_numbers<[1], [0], [0], [1], [0, 0, 1, 1], [], []>} : vector<16x16xbf16>, vector<16x128xbf16>, vector<16x128xf32> -> vector<16x128xf32>
    %7 = vector.extract_strided_slice %1 {offsets = [0, 0], sizes = [1, 128], strides = [1, 1]} : vector<3x128xf32> to vector<1x128xf32>
    %8 = vector.broadcast %7 : vector<1x128xf32> to vector<16x128xf32>
    %9 = arith.addf %6, %8 : vector<16x128xf32>
    %cst_8 = arith.constant 0.000000e+00 : f32
    %10 = vector.broadcast %cst_8 : f32 to vector<16x128xf32>
    %11 = arith.maximumf %9, %10 : vector<16x128xf32>
    %12 = arith.truncf %11 : vector<16x128xf32> to vector<16x128xbf16>
    %cst_9 = arith.constant dense<0.000000e+00> : vector<16x128xf32>
    %13 = tpu.matmul %0, %12, %cst_9 {dimension_numbers = #tpu.dot_dimension_numbers<[1], [0], [0], [1], [0, 0, 1, 1], [], []>} : vector<16x16xbf16>, vector<16x128xbf16>, vector<16x128xf32> -> vector<16x128xf32>
    %14 = arith.truncf %13 : vector<16x128xf32> to vector<16x128xbf16>
    %c128 = arith.constant 128 : index
    %c0_10 = arith.constant 0 : index
    %15 = vector.load %arg2[%c128, %c0_10] : memref<512x128xbf16, #tpu.memory_space<vmem>>, vector<128x128xbf16>
    %cst_11 = arith.constant dense<0.000000e+00> : vector<16x128xf32>
    %16 = tpu.matmul %14, %15, %cst_11 {dimension_numbers = #tpu.dot_dimension_numbers<[1], [0], [0], [1], [0, 0, 1, 1], [], []>} : vector<16x128xbf16>, vector<128x128xbf16>, vector<16x128xf32> -> vector<16x128xf32>
    %17 = vector.extract_strided_slice %1 {offsets = [1, 0], sizes = [1, 128], strides = [1, 1]} : vector<3x128xf32> to vector<1x128xf32>
    %18 = vector.broadcast %17 : vector<1x128xf32> to vector<16x128xf32>
    %19 = arith.addf %16, %18 : vector<16x128xf32>
    %cst_12 = arith.constant 0.000000e+00 : f32
    %20 = vector.broadcast %cst_12 : f32 to vector<16x128xf32>
    %21 = arith.maximumf %19, %20 : vector<16x128xf32>
    %22 = arith.truncf %21 : vector<16x128xf32> to vector<16x128xbf16>
    %cst_13 = arith.constant dense<0.000000e+00> : vector<16x128xf32>
    %23 = tpu.matmul %0, %22, %cst_13 {dimension_numbers = #tpu.dot_dimension_numbers<[1], [0], [0], [1], [0, 0, 1, 1], [], []>} : vector<16x16xbf16>, vector<16x128xbf16>, vector<16x128xf32> -> vector<16x128xf32>
    %24 = arith.truncf %23 : vector<16x128xf32> to vector<16x128xbf16>
    %25 = tpu.concatenate %14, %24 in 1 : vector<16x128xbf16>, vector<16x128xbf16> -> vector<16x256xbf16>
    %c256 = arith.constant 256 : index
    %c0_14 = arith.constant 0 : index
    %26 = vector.load %arg2[%c256, %c0_14] : memref<512x128xbf16, #tpu.memory_space<vmem>>, vector<256x128xbf16>
    %cst_15 = arith.constant dense<0.000000e+00> : vector<16x128xf32>
    %27 = tpu.matmul %25, %26, %cst_15 {dimension_numbers = #tpu.dot_dimension_numbers<[1], [0], [0], [1], [0, 0, 1, 1], [], []>} : vector<16x256xbf16>, vector<256x128xbf16>, vector<16x128xf32> -> vector<16x128xf32>
    %28 = vector.extract_strided_slice %1 {offsets = [2, 0], sizes = [1, 128], strides = [1, 1]} : vector<3x128xf32> to vector<1x128xf32>
    %29 = vector.broadcast %28 : vector<1x128xf32> to vector<16x128xf32>
    %30 = arith.addf %27, %29 : vector<16x128xf32>
    %cst_16 = arith.constant dense<0xFF800000> : vector<16xf32>
    %31 = vector.multi_reduction <maximumf>, %30, %cst_16 [1] : vector<16x128xf32> to vector<16xf32>
    %32 = vector.shape_cast %31 : vector<16xf32> to vector<16x1xf32>
    %33 = vector.broadcast %32 : vector<16x1xf32> to vector<16x128xf32>
    %34 = arith.subf %30, %33 : vector<16x128xf32>
    %35 = math.exp %34 : vector<16x128xf32>
    %cst_17 = arith.constant dense<0.000000e+00> : vector<16xf32>
    %36 = vector.multi_reduction <add>, %35, %cst_17 [1] : vector<16x128xf32> to vector<16xf32>
    %37 = vector.shape_cast %36 : vector<16xf32> to vector<16x1xf32>
    %38 = tpu.reciprocal %37 {approx = true} : vector<16x1xf32> -> vector<16x1xf32>
    %39 = vector.broadcast %38 : vector<16x1xf32> to vector<16x128xf32>
    %40 = arith.mulf %35, %39 : vector<16x128xf32>
    %c0_18 = arith.constant 0 : index
    %c0_19 = arith.constant 0 : index
    %41 = vector.load %arg4[%c0_18, %c0_19] : memref<16x128xf32, #tpu.memory_space<vmem>>, vector<16x128xf32>
    tpu.vector_store %arg4[%c0_18, %c0_19], %40 {strides = array<i32>} : memref<16x128xf32, #tpu.memory_space<vmem>>, vector<16x128xf32>,
    return
  }
}

</mosaic_0001>

<llo_original>
// kernel: jaws_forward.1
$region0: #{jaws_forward.1}
  #allocation0 [shape = 'u32[]', space=smem, size = 0x4, offset = 0x4, fixed_abs, tag = 'smem constant byte address 0x4 - core index']
  #allocation1 [shape = 'u32[144,128]{1,0:T(1,128)}', space=vmem, size = 0x12000, scoped, tag = 'internal scratch']
  %s0 = inlined_call_operand.vmem [shape: bf16[16,16], index: 0, kind: input, shape index: {}]
  %s1 = inlined_call_operand.vmem [shape: bf16[16,128], index: 1, kind: input, shape index: {}]
  %s2 = inlined_call_operand.hbm [shape: bf16[512,128], index: 2, kind: input, shape index: {}]
  %s3 = inlined_call_operand.vmem [shape: f32[3,128], index: 3, kind: input, shape index: {}]
  %s4 = inlined_call_operand.vmem [shape: f32[16,128], index: 4, kind: output, shape index: {}]
  %s5 = sld [smem:[#allocation0]]
  $region30: #{jaws_forward.1} parent=0
    _
  %s7 = ssub.s32 1, %s5
  %s8 = scalar_select 0, %s7, %s5
  $region1: #{jaws_forward.1} parent=0
    #allocation2 [shape = 'u8[131072]{0}', space=vmem, size = 0x20000, scoped, tag = 'input window, operand 2, single buffered']
    #allocation3 [shape = 's32[1]{0}', space=sflag, size = 0x4, scoped, tag = 'scoped memory for jaws_forward.1']
    %9 = vsyncpa [#allocation3], 0
    // Predicated region
    $region2: #{jaws_forward.1} parent=1 // pred_check
      _
    $region3: #{jaws_forward.1} parent=1 // pred_check_branch
      %11 = sbr.rel (0) target = $region5
    $region4: #{jaws_forward.1} parent=1 // pred_region
      _
    $region5: #{jaws_forward.1} parent=1 // pred_fallthru
      _
    // Predicated region
    $region6: #{jaws_forward.1} parent=1 // pred_check
      _
    $region7: #{jaws_forward.1} parent=1 // pred_check_branch
      %13 = sbr.rel (0) target = $region9
    $region8: #{jaws_forward.1} parent=1 // pred_region
      _
    $region9: #{jaws_forward.1} parent=1 // pred_fallthru
      _
    // Predicated region
    $region10: #{jaws_forward.1} parent=1 // pred_check
      _
    $region11: #{jaws_forward.1} parent=1 // pred_check_branch
      %15 = sbr.rel (0) target = $region13
    $region12: #{jaws_forward.1} parent=1 // pred_region
      %s17 = ssub.s32 4096, 4096
      %18 = vsyncadd [#allocation3], %s17
      %s19 = sshll.u32 [#allocation2], 4
      %s20 = int_to_ptr.vmem [resolvable:$true] %s19
      %25 = dma.hbm_to_vmem [thread:$0]  %s2, 4096, %s20, [#allocation3], 64, 64, 4
    $region13: #{jaws_forward.1} parent=1 // pred_fallthru
      _
    // Predicated region
    $region14: #{jaws_forward.1} parent=1 // pred_check
      _
    $region15: #{jaws_forward.1} parent=1 // pred_check_branch
      %27 = sbr.rel (0) target = $region17
    $region16: #{jaws_forward.1} parent=1 // pred_region
      _
    $region17: #{jaws_forward.1} parent=1 // pred_fallthru
      _
    // Predicated region
    $region18: #{jaws_forward.1} parent=1 // pred_check
      _
    $region19: #{jaws_forward.1} parent=1 // pred_check_branch
      %29 = sbr.rel (0) target = $region21
    $region20: #{jaws_forward.1} parent=1 // pred_region
      %30 = dma.done [#allocation3], 4096
    $region21: #{jaws_forward.1} parent=1 // pred_fallthru
      _
    %v32 = vld [vmem:[%s0] sm:$0xf]
    %v33 = vld [vmem:[%s0 + $0x4] sm:$0xf]
    %v34 = vld [vmem:[%s3] sm:$0x7]
    %v35 = vld [vmem:[%s1] sm:$0xf]
    %v36 = vld [vmem:[%s1 + $0x4] sm:$0xf]
    %v37 = vld [vmem:[#allocation2] sm:$0xf]
    %v38 = vld [vmem:[#allocation2 + $0x4] sm:$0xf]
    %v39 = vld [vmem:[#allocation2 + $0x8] sm:$0xf]
    %v40 = vld [vmem:[#allocation2 + $0xc] sm:$0xf]
    %v41 = vld [vmem:[#allocation2 + $0x10] sm:$0xf]
    %v42 = vld [vmem:[#allocation2 + $0x14] sm:$0xf]
    %v43 = vld [vmem:[#allocation2 + $0x18] sm:$0xf]
    %v44 = vld [vmem:[#allocation2 + $0x1c] sm:$0xf]
    %v45 = vld [vmem:[#allocation2 + $0x20] sm:$0xf]
    %v46 = vld [vmem:[#allocation2 + $0x24] sm:$0xf]
    %v47 = vld [vmem:[#allocation2 + $0x28] sm:$0xf]
    %v48 = vld [vmem:[#allocation2 + $0x2c] sm:$0xf]
    %v49 = vld [vmem:[#allocation2 + $0x30] sm:$0xf]
    %v50 = vld [vmem:[#allocation2 + $0x34] sm:$0xf]
    %v51 = vld [vmem:[#allocation2 + $0x38] sm:$0xf]
    %v52 = vld [vmem:[#allocation2 + $0x3c] sm:$0xf]
    %v55 = vunpack.c.l.b16 %v35
    %v56 = vunpack.c.l.b16 %v36
    %v57 = vpack.c.b16 %v56, %v55
    %v75 = vunpack.c.l.b16 %v37
    %v76 = vunpack.c.l.b16 %v38
    %v77 = vunpack.c.l.b16 %v39
    %v78 = vunpack.c.l.b16 %v40
    %v79 = vunpack.c.l.b16 %v41
    %v80 = vunpack.c.l.b16 %v42
    %v81 = vunpack.c.l.b16 %v43
    %v82 = vunpack.c.l.b16 %v44
    %v83 = vunpack.c.l.b16 %v45
    %v84 = vunpack.c.l.b16 %v46
    %v85 = vunpack.c.l.b16 %v47
    %v86 = vunpack.c.l.b16 %v48
    %v87 = vunpack.c.l.b16 %v49
    %v88 = vunpack.c.l.b16 %v50
    %v89 = vunpack.c.l.b16 %v51
    %v90 = vunpack.c.l.b16 %v52
    %v91 = vpack.c.b16 %v76, %v75
    %v92 = vpack.c.b16 %v78, %v77
    %v93 = vpack.c.b16 %v80, %v79
    %v94 = vpack.c.b16 %v82, %v81
    %v95 = vpack.c.b16 %v84, %v83
    %v96 = vpack.c.b16 %v86, %v85
    %v97 = vpack.c.b16 %v88, %v87
    %v98 = vpack.c.b16 %v90, %v89
    %107 = vmatprep.subr.bf16.mxu0 0
    %108 = vmatpush1.bf16.msra.mxu0 %v91
    %109 = vmatprep.subr.bf16.mxu0 0
    %110 = vmatpush1.bf16.msra.mxu0 %v92
    %111 = vmatprep.subr.bf16.mxu0 0
    %112 = vmatpush1.bf16.msra.mxu0 %v93
    %113 = vmatprep.subr.bf16.mxu0 0
    %114 = vmatpush1.bf16.msra.mxu0 %v94
    %115 = vmatprep.subr.bf16.mxu0 0
    %116 = vmatpush1.bf16.msra.mxu0 %v95
    %117 = vmatprep.subr.bf16.mxu0 0
    %118 = vmatpush1.bf16.msra.mxu0 %v96
    %119 = vmatprep.subr.bf16.mxu0 0
    %120 = vmatpush1.bf16.msra.mxu0 %v97
    %121 = vmatprep.subr.bf16.mxu0 0
    %122 = vmatpush1.bf16.msra.mxu0 %v98
    %123 = vmatprep.subr.bf16.mxu0 0
    %124 = vmatpush1.bf16.msra.mxu0 0
    %125 = vmatprep.subr.bf16.mxu0 0
    %126 = vmatpush1.bf16.msra.mxu0 0
    %127 = vmatprep.subr.bf16.mxu0 0
    %128 = vmatpush1.bf16.msra.mxu0 0
    %129 = vmatprep.subr.bf16.mxu0 0
    %130 = vmatpush1.bf16.msra.mxu0 0
    %131 = vmatprep.subr.bf16.mxu0 0
    %132 = vmatpush1.bf16.msra.mxu0 0
    %133 = vmatprep.subr.bf16.mxu0 0
    %134 = vmatpush1.bf16.msra.mxu0 0
    %135 = vmatprep.subr.bf16.mxu0 0
    %136 = vmatpush1.bf16.msra.mxu0 0
    %137 = vmatprep.subr.bf16.mxu0 0
    %138 = vmatpush1.bf16.msra.mxu0 0
    %139 = vmatprep.mubr.bf16.mxu0 0
    %140 = vmatmul.mubr.bf16.gmra.mrb[0].mxu0 %v57
    %v141 = vpop.f32.mrb[0].mxu0
    %v142 = vadd.f32 0.0, %v141
    %v143 = vpop.f32.mrb[0].mxu0
    %v144 = vpop.f32.mrb[0].mxu0
    %v145 = vadd.f32 0.0, %v144
    %v146 = vpop.f32.mrb[0].mxu0
    %147 = vdwg.mxu0
    %v148 = vpack.c.bf16 %v145, %v142
    %v149 = vlaneseq
    %v150 = vshrl.u32 %v149, 7
    %v151 = vsub.s32 0, %v150
    %v152 = vrot.slane %v34, %v151
    %v155 = vunpack.c.l.b16 %v32
    %v156 = vunpack.c.l.b16 %v33
    %v157 = vpack.c.b16 %v156, %v155
    %vm158 = vcmask 130048
    %v160 = vsel %vm158, %v157, 0
    %162 = vmatprep.subr.bf16.mxu0 0
    %163 = vmatpush1.bf16.msra.mxu0 %v148
    %164 = vmatprep.subr.bf16.mxu0 0
    %165 = vmatpush1.bf16.msra.mxu0 0
    %166 = vmatprep.subr.bf16.mxu0 0
    %167 = vmatpush1.bf16.msra.mxu0 0
    %168 = vmatprep.subr.bf16.mxu0 0
    %169 = vmatpush1.bf16.msra.mxu0 0
    %170 = vmatprep.subr.bf16.mxu0 0
    %171 = vmatpush1.bf16.msra.mxu0 0
    %172 = vmatprep.subr.bf16.mxu0 0
    %173 = vmatpush1.bf16.msra.mxu0 0
    %174 = vmatprep.subr.bf16.mxu0 0
    %175 = vmatpush1.bf16.msra.mxu0 0
    %176 = vmatprep.subr.bf16.mxu0 0
    %177 = vmatpush1.bf16.msra.mxu0 0
    %178 = vmatprep.subr.bf16.mxu0 0
    %179 = vmatpush1.bf16.msra.mxu0 0
    %180 = vmatprep.subr.bf16.mxu0 0
    %181 = vmatpush1.bf16.msra.mxu0 0
    %182 = vmatprep.subr.bf16.mxu0 0
    %183 = vmatpush1.bf16.msra.mxu0 0
    %184 = vmatprep.subr.bf16.mxu0 0
    %185 = vmatpush1.bf16.msra.mxu0 0
    %186 = vmatprep.subr.bf16.mxu0 0
    %187 = vmatpush1.bf16.msra.mxu0 0
    %188 = vmatprep.subr.bf16.mxu0 0
    %189 = vmatpush1.bf16.msra.mxu0 0
    %190 = vmatprep.subr.bf16.mxu0 0
    %191 = vmatpush1.bf16.msra.mxu0 0
    %192 = vmatprep.subr.bf16.mxu0 0
    %193 = vmatpush1.bf16.msra.mxu0 0
    %194 = vmatprep.mubr.bf16.mxu0 0
    %195 = vmatmul.mubr.bf16.gmra.mrb[0].mxu0 %v160
    %v196 = vpop.f32.mrb[0].mxu0
    %v197 = vadd.f32 %v152, %v196
    %v198 = vpop.f32.mrb[0].mxu0
    %v199 = vpop.f32.mrb[0].mxu0
    %v200 = vadd.f32 %v152, %v199
    %v201 = vpop.f32.mrb[0].mxu0
    %202 = vdwg.mxu0
    %v203 = vmax.f32 %v197, 0.0
    %v204 = vmax.f32 %v200, 0.0
    %v205 = vpack.c.bf16 %v204, %v203
    %206 = vmatprep.subr.bf16.mxu0 0
    %207 = vmatpush1.bf16.msra.mxu0 %v205
    %208 = vmatprep.subr.bf16.mxu0 0
    %209 = vmatpush1.bf16.msra.mxu0 0
    %210 = vmatprep.subr.bf16.mxu0 0
    %211 = vmatpush1.bf16.msra.mxu0 0
    %212 = vmatprep.subr.bf16.mxu0 0
    %213 = vmatpush1.bf16.msra.mxu0 0
    %214 = vmatprep.subr.bf16.mxu0 0
    %215 = vmatpush1.bf16.msra.mxu0 0
    %216 = vmatprep.subr.bf16.mxu0 0
    %217 = vmatpush1.bf16.msra.mxu0 0
    %218 = vmatprep.subr.bf16.mxu0 0
    %219 = vmatpush1.bf16.msra.mxu0 0
    %220 = vmatprep.subr.bf16.mxu0 0
    %221 = vmatpush1.bf16.msra.mxu0 0
    %222 = vmatprep.subr.bf16.mxu0 0
    %223 = vmatpush1.bf16.msra.mxu0 0
    %224 = vmatprep.subr.bf16.mxu0 0
    %225 = vmatpush1.bf16.msra.mxu0 0
    %226 = vmatprep.subr.bf16.mxu0 0
    %227 = vmatpush1.bf16.msra.mxu0 0
    %228 = vmatprep.subr.bf16.mxu0 0
    %229 = vmatpush1.bf16.msra.mxu0 0
    %230 = vmatprep.subr.bf16.mxu0 0
    %231 = vmatpush1.bf16.msra.mxu0 0
    %232 = vmatprep.subr.bf16.mxu0 0
    %233 = vmatpush1.bf16.msra.mxu0 0
    %234 = vmatprep.subr.bf16.mxu0 0
    %235 = vmatpush1.bf16.msra.mxu0 0
    %236 = vmatprep.subr.bf16.mxu0 0
    %237 = vmatpush1.bf16.msra.mxu0 0
    %238 = vmatprep.mubr.bf16.mxu0 0
    %239 = vmatmul.mubr.bf16.gmra.mrb[0].mxu0 %v160
    %v240 = vpop.f32.mrb[0].mxu0
    %v241 = vadd.f32 0.0, %v240
    %v242 = vpop.f32.mrb[0].mxu0
    %v243 = vpop.f32.mrb[0].mxu0
    %v244 = vadd.f32 0.0, %v243
    %v245 = vpop.f32.mrb[0].mxu0
    %246 = vdwg.mxu0
    %v247 = vpack.c.bf16 %v244, %v241
    %v248 = vld [vmem:[#allocation2 + $0x40] sm:$0xf]
    %v249 = vld [vmem:[#allocation2 + $0x44] sm:$0xf]
    %v250 = vld [vmem:[#allocation2 + $0x48] sm:$0xf]
    %v251 = vld [vmem:[#allocation2 + $0x4c] sm:$0xf]
    %v252 = vld [vmem:[#allocation2 + $0x50] sm:$0xf]
    %v253 = vld [vmem:[#allocation2 + $0x54] sm:$0xf]
    %v254 = vld [vmem:[#allocation2 + $0x58] sm:$0xf]
    %v255 = vld [vmem:[#allocation2 + $0x5c] sm:$0xf]
    %v256 = vld [vmem:[#allocation2 + $0x60] sm:$0xf]
    %v257 = vld [vmem:[#allocation2 + $0x64] sm:$0xf]
    %v258 = vld [vmem:[#allocation2 + $0x68] sm:$0xf]
    %v259 = vld [vmem:[#allocation2 + $0x6c] sm:$0xf]
    %v260 = vld [vmem:[#allocation2 + $0x70] sm:$0xf]
    %v261 = vld [vmem:[#allocation2 + $0x74] sm:$0xf]
    %v262 = vld [vmem:[#allocation2 + $0x78] sm:$0xf]
    %v263 = vld [vmem:[#allocation2 + $0x7c] sm:$0xf]
    %v264 = vlaneseq
    %v265 = vshrl.u32 %v264, 7
    %v266 = vsub.s32 1, %v265
    %v267 = vrot.slane %v34, %v266
    %v284 = vunpack.c.l.b16 %v248
    %v285 = vunpack.c.l.b16 %v249
    %v286 = vunpack.c.l.b16 %v250
    %v287 = vunpack.c.l.b16 %v251
    %v288 = vunpack.c.l.b16 %v252
    %v289 = vunpack.c.l.b16 %v253
    %v290 = vunpack.c.l.b16 %v254
    %v291 = vunpack.c.l.b16 %v255
    %v292 = vunpack.c.l.b16 %v256
    %v293 = vunpack.c.l.b16 %v257
    %v294 = vunpack.c.l.b16 %v258
    %v295 = vunpack.c.l.b16 %v259
    %v296 = vunpack.c.l.b16 %v260
    %v297 = vunpack.c.l.b16 %v261
    %v298 = vunpack.c.l.b16 %v262
    %v299 = vunpack.c.l.b16 %v263
    %v300 = vpack.c.b16 %v285, %v284
    %v301 = vpack.c.b16 %v287, %v286
    %v302 = vpack.c.b16 %v289, %v288
    %v303 = vpack.c.b16 %v291, %v290
    %v304 = vpack.c.b16 %v293, %v292
    %v305 = vpack.c.b16 %v295, %v294
    %v306 = vpack.c.b16 %v297, %v296
    %v307 = vpack.c.b16 %v299, %v298
    %316 = vmatprep.subr.bf16.mxu0 0
    %317 = vmatpush1.bf16.msra.mxu0 %v300
    %318 = vmatprep.subr.bf16.mxu0 0
    %319 = vmatpush1.bf16.msra.mxu0 %v301
    %320 = vmatprep.subr.bf16.mxu0 0
    %321 = vmatpush1.bf16.msra.mxu0 %v302
    %322 = vmatprep.subr.bf16.mxu0 0
    %323 = vmatpush1.bf16.msra.mxu0 %v303
    %324 = vmatprep.subr.bf16.mxu0 0
    %325 = vmatpush1.bf16.msra.mxu0 %v304
    %326 = vmatprep.subr.bf16.mxu0 0
    %327 = vmatpush1.bf16.msra.mxu0 %v305
    %328 = vmatprep.subr.bf16.mxu0 0
    %329 = vmatpush1.bf16.msra.mxu0 %v306
    %330 = vmatprep.subr.bf16.mxu0 0
    %331 = vmatpush1.bf16.msra.mxu0 %v307
    %332 = vmatprep.subr.bf16.mxu0 0
    %333 = vmatpush1.bf16.msra.mxu0 0
    %334 = vmatprep.subr.bf16.mxu0 0
    %335 = vmatpush1.bf16.msra.mxu0 0
    %336 = vmatprep.subr.bf16.mxu0 0
    %337 = vmatpush1.bf16.msra.mxu0 0
    %338 = vmatprep.subr.bf16.mxu0 0
    %339 = vmatpush1.bf16.msra.mxu0 0
    %340 = vmatprep.subr.bf16.mxu0 0
    %341 = vmatpush1.bf16.msra.mxu0 0
    %342 = vmatprep.subr.bf16.mxu0 0
    %343 = vmatpush1.bf16.msra.mxu0 0
    %344 = vmatprep.subr.bf16.mxu0 0
    %345 = vmatpush1.bf16.msra.mxu0 0
    %346 = vmatprep.subr.bf16.mxu0 0
    %347 = vmatpush1.bf16.msra.mxu0 0
    %348 = vmatprep.mubr.bf16.mxu0 0
    %349 = vmatmul.mubr.bf16.gmra.mrb[0].mxu0 %v247
    %v350 = vpop.f32.mrb[0].mxu0
    %v351 = vadd.f32 %v267, %v350
    %v352 = vpop.f32.mrb[0].mxu0
    %v353 = vpop.f32.mrb[0].mxu0
    %v354 = vadd.f32 %v267, %v353
    %v355 = vpop.f32.mrb[0].mxu0
    %356 = vdwg.mxu0
    %v357 = vmax.f32 %v351, 0.0
    %v358 = vmax.f32 %v354, 0.0
    %v359 = vpack.c.bf16 %v358, %v357
    %360 = vmatprep.subr.bf16.mxu0 0
    %361 = vmatpush1.bf16.msra.mxu0 %v359
    %362 = vmatprep.subr.bf16.mxu0 0
    %363 = vmatpush1.bf16.msra.mxu0 0
    %364 = vmatprep.subr.bf16.mxu0 0
    %365 = vmatpush1.bf16.msra.mxu0 0
    %366 = vmatprep.subr.bf16.mxu0 0
    %367 = vmatpush1.bf16.msra.mxu0 0
    %368 = vmatprep.subr.bf16.mxu0 0
    %369 = vmatpush1.bf16.msra.mxu0 0
    %370 = vmatprep.subr.bf16.mxu0 0
    %371 = vmatpush1.bf16.msra.mxu0 0
    %372 = vmatprep.subr.bf16.mxu0 0
    %373 = vmatpush1.bf16.msra.mxu0 0
    %374 = vmatprep.subr.bf16.mxu0 0
    %375 = vmatpush1.bf16.msra.mxu0 0
    %376 = vmatprep.subr.bf16.mxu0 0
    %377 = vmatpush1.bf16.msra.mxu0 0
    %378 = vmatprep.subr.bf16.mxu0 0
    %379 = vmatpush1.bf16.msra.mxu0 0
    %380 = vmatprep.subr.bf16.mxu0 0
    %381 = vmatpush1.bf16.msra.mxu0 0
    %382 = vmatprep.subr.bf16.mxu0 0
    %383 = vmatpush1.bf16.msra.mxu0 0
    %384 = vmatprep.subr.bf16.mxu0 0
    %385 = vmatpush1.bf16.msra.mxu0 0
    %386 = vmatprep.subr.bf16.mxu0 0
    %387 = vmatpush1.bf16.msra.mxu0 0
    %388 = vmatprep.subr.bf16.mxu0 0
    %389 = vmatpush1.bf16.msra.mxu0 0
    %390 = vmatprep.subr.bf16.mxu0 0
    %391 = vmatpush1.bf16.msra.mxu0 0
    %392 = vmatprep.mubr.bf16.mxu0 0
    %393 = vmatmul.mubr.bf16.gmra.mrb[0].mxu0 %v160
    %v394 = vpop.f32.mrb[0].mxu0
    %v395 = vadd.f32 0.0, %v394
    %v396 = vpop.f32.mrb[0].mxu0
    %v397 = vpop.f32.mrb[0].mxu0
    %v398 = vadd.f32 0.0, %v397
    %v399 = vpop.f32.mrb[0].mxu0
    %400 = vdwg.mxu0
    %v401 = vpack.c.bf16 %v398, %v395
    %v402 = vld [vmem:[#allocation2 + $0x80] sm:$0xf]
    %v403 = vld [vmem:[#allocation2 + $0x84] sm:$0xf]
    %v404 = vld [vmem:[#allocation2 + $0x88] sm:$0xf]
    %v405 = vld [vmem:[#allocation2 + $0x8c] sm:$0xf]
    %v406 = vld [vmem:[#allocation2 + $0x90] sm:$0xf]
    %v407 = vld [vmem:[#allocation2 + $0x94] sm:$0xf]
    %v408 = vld [vmem:[#allocation2 + $0x98] sm:$0xf]
    %v409 = vld [vmem:[#allocation2 + $0x9c] sm:$0xf]
    %v410 = vld [vmem:[#allocation2 + $0xa0] sm:$0xf]
    %v411 = vld [vmem:[#allocation2 + $0xa4] sm:$0xf]
    %v412 = vld [vmem:[#allocation2 + $0xa8] sm:$0xf]
    %v413 = vld [vmem:[#allocation2 + $0xac] sm:$0xf]
    %v414 = vld [vmem:[#allocation2 + $0xb0] sm:$0xf]
    %v415 = vld [vmem:[#allocation2 + $0xb4] sm:$0xf]
    %v416 = vld [vmem:[#allocation2 + $0xb8] sm:$0xf]
    %v417 = vld [vmem:[#allocation2 + $0xbc] sm:$0xf]
    %v418 = vld [vmem:[#allocation2 + $0xc0] sm:$0xf]
    %v419 = vld [vmem:[#allocation2 + $0xc4] sm:$0xf]
    %v420 = vld [vmem:[#allocation2 + $0xc8] sm:$0xf]
    %v421 = vld [vmem:[#allocation2 + $0xcc] sm:$0xf]
    %v422 = vld [vmem:[#allocation2 + $0xd0] sm:$0xf]
    %v423 = vld [vmem:[#allocation2 + $0xd4] sm:$0xf]
    %v424 = vld [vmem:[#allocation2 + $0xd8] sm:$0xf]
    %v425 = vld [vmem:[#allocation2 + $0xdc] sm:$0xf]
    %v426 = vld [vmem:[#allocation2 + $0xe0] sm:$0xf]
    %v427 = vld [vmem:[#allocation2 + $0xe4] sm:$0xf]
    %v428 = vld [vmem:[#allocation2 + $0xe8] sm:$0xf]
    %v429 = vld [vmem:[#allocation2 + $0xec] sm:$0xf]
    %v430 = vld [vmem:[#allocation2 + $0xf0] sm:$0xf]
    %v431 = vld [vmem:[#allocation2 + $0xf4] sm:$0xf]
    %v432 = vld [vmem:[#allocation2 + $0xf8] sm:$0xf]
    %v433 = vld [vmem:[#allocation2 + $0xfc] sm:$0xf]
    %v434 = vlaneseq
    %v435 = vshrl.u32 %v434, 7
    %v436 = vsub.s32 2, %v435
    %v437 = vrot.slane %v34, %v436
    %v470 = vunpack.c.l.b16 %v402
    %v471 = vunpack.c.l.b16 %v403
    %v472 = vunpack.c.l.b16 %v404
    %v473 = vunpack.c.l.b16 %v405
    %v474 = vunpack.c.l.b16 %v406
    %v475 = vunpack.c.l.b16 %v407
    %v476 = vunpack.c.l.b16 %v408
    %v477 = vunpack.c.l.b16 %v409
    %v478 = vunpack.c.l.b16 %v410
    %v479 = vunpack.c.l.b16 %v411
    %v480 = vunpack.c.l.b16 %v412
    %v481 = vunpack.c.l.b16 %v413
    %v482 = vunpack.c.l.b16 %v414
    %v483 = vunpack.c.l.b16 %v415
    %v484 = vunpack.c.l.b16 %v416
    %v485 = vunpack.c.l.b16 %v417
    %v486 = vunpack.c.l.b16 %v418
    %v487 = vunpack.c.l.b16 %v419
    %v488 = vunpack.c.l.b16 %v420
    %v489 = vunpack.c.l.b16 %v421
    %v490 = vunpack.c.l.b16 %v422
    %v491 = vunpack.c.l.b16 %v423
    %v492 = vunpack.c.l.b16 %v424
    %v493 = vunpack.c.l.b16 %v425
    %v494 = vunpack.c.l.b16 %v426
    %v495 = vunpack.c.l.b16 %v427
    %v496 = vunpack.c.l.b16 %v428
    %v497 = vunpack.c.l.b16 %v429
    %v498 = vunpack.c.l.b16 %v430
    %v499 = vunpack.c.l.b16 %v431
    %v500 = vunpack.c.l.b16 %v432
    %v501 = vunpack.c.l.b16 %v433
    %v502 = vpack.c.b16 %v471, %v470
    %v503 = vpack.c.b16 %v473, %v472
    %v504 = vpack.c.b16 %v475, %v474
    %v505 = vpack.c.b16 %v477, %v476
    %v506 = vpack.c.b16 %v479, %v478
    %v507 = vpack.c.b16 %v481, %v480
    %v508 = vpack.c.b16 %v483, %v482
    %v509 = vpack.c.b16 %v485, %v484
    %v510 = vpack.c.b16 %v487, %v486
    %v511 = vpack.c.b16 %v489, %v488
    %v512 = vpack.c.b16 %v491, %v490
    %v513 = vpack.c.b16 %v493, %v492
    %v514 = vpack.c.b16 %v495, %v494
    %v515 = vpack.c.b16 %v497, %v496
    %v516 = vpack.c.b16 %v499, %v498
    %v517 = vpack.c.b16 %v501, %v500
    %534 = vmatprep.subr.bf16.mxu0 0
    %535 = vmatpush1.bf16.msra.mxu0 %v502
    %536 = vmatprep.subr.bf16.mxu0 0
    %537 = vmatpush1.bf16.msra.mxu0 %v503
    %538 = vmatprep.subr.bf16.mxu0 0
    %539 = vmatpush1.bf16.msra.mxu0 %v504
    %540 = vmatprep.subr.bf16.mxu0 0
    %541 = vmatpush1.bf16.msra.mxu0 %v505
    %542 = vmatprep.subr.bf16.mxu0 0
    %543 = vmatpush1.bf16.msra.mxu0 %v506
    %544 = vmatprep.subr.bf16.mxu0 0
    %545 = vmatpush1.bf16.msra.mxu0 %v507
    %546 = vmatprep.subr.bf16.mxu0 0
    %547 = vmatpush1.bf16.msra.mxu0 %v508
    %548 = vmatprep.subr.bf16.mxu0 0
    %549 = vmatpush1.bf16.msra.mxu0 %v509
    %550 = vmatprep.subr.bf16.mxu0 0
    %551 = vmatpush1.bf16.msra.mxu0 %v510
    %552 = vmatprep.subr.bf16.mxu0 0
    %553 = vmatpush1.bf16.msra.mxu0 %v511
    %554 = vmatprep.subr.bf16.mxu0 0
    %555 = vmatpush1.bf16.msra.mxu0 %v512
    %556 = vmatprep.subr.bf16.mxu0 0
    %557 = vmatpush1.bf16.msra.mxu0 %v513
    %558 = vmatprep.subr.bf16.mxu0 0
    %559 = vmatpush1.bf16.msra.mxu0 %v514
    %560 = vmatprep.subr.bf16.mxu0 0
    %561 = vmatpush1.bf16.msra.mxu0 %v515
    %562 = vmatprep.subr.bf16.mxu0 0
    %563 = vmatpush1.bf16.msra.mxu0 %v516
    %564 = vmatprep.subr.bf16.mxu0 0
    %565 = vmatpush1.bf16.msra.mxu0 %v517
    %566 = vmatprep.mubr.bf16.mxu0 %v401
    %567 = vmatmul.mubr.bf16.gmra.mrb[0].mxu0 %v247
    %v568 = vpop.f32.mrb[0].mxu0
    %v569 = vadd.f32 %v437, %v568
    %v570 = vpop.f32.mrb[0].mxu0
    %v571 = vpop.f32.mrb[0].mxu0
    %v572 = vadd.f32 %v437, %v571
    %v573 = vpop.f32.mrb[0].mxu0
    %574 = vdwg.mxu0
    %575 = vmax.xlane.f32.xlu0 %v569
    %v576 = vpop.xlane.xlu0 %575
    %577 = vmax.xlane.f32.xlu0 %v572
    %v578 = vpop.xlane.xlu0 %577
    %v579 = vsub.f32 %v569, %v576
    %v580 = vsub.f32 %v572, %v578
    %v581 = vmul.f32 %v579, 1.442695
    %v582 = vpow.pop %v581
    %v583 = vmul.f32 %v580, 1.442695
    %v584 = vpow.pop %v583
    %585 = vadd.xlane.f32.xlu0 %v582
    %v586 = vpop.xlane.xlu0 %585
    %587 = vadd.xlane.f32.xlu0 %v584
    %v588 = vpop.xlane.xlu0 %587
    %v589 = vrcp.pop %v586
    %v590 = vrcp.pop %v588
    %v591 = vmul.f32 %v582, %v589
    %v592 = vmul.f32 %v584, %v590
    %593 = vst [vmem:[%s4] sm:$0xff] %v591
    %594 = vst [vmem:[%s4 + $0x8] sm:$0xff] %v592
    // Predicated region
    $region22: #{jaws_forward.1} parent=1 // pred_check
      _
    $region23: #{jaws_forward.1} parent=1 // pred_check_branch
      %596 = sbr.rel (0) target = $region25
    $region24: #{jaws_forward.1} parent=1 // pred_region
      _
    $region25: #{jaws_forward.1} parent=1 // pred_fallthru
      _
    // Predicated region
    $region26: #{jaws_forward.1} parent=1 // pred_check
      _
    $region27: #{jaws_forward.1} parent=1 // pred_check_branch
      %598 = sbr.rel (0) target = $region29
    $region28: #{jaws_forward.1} parent=1 // pred_region
      _
    $region29: #{jaws_forward.1} parent=1 // pred_fallthru
      _
    %599 = vsyncpa [#allocation3], 1

</llo_original>
